<compile_context>
chip_gen: v5e
topology: v5e:2x2
jax: 0.10.0
libtpu: 0.0.40
codegen_flags: <defaults>
</compile_context>

<pallas_src>
import functools

import jax
import jax.numpy as jnp
from jax.experimental import pallas as pl
from jax.experimental.pallas import tpu as pltpu


def _round_up(x, m):
    return (x + m - 1) // m * m


def _simple_model_kernel(x_ref, y_ref, w1_ref, b1_ref, w2_ref, b2_ref,
                         w3_ref, b3_ref, out_ref, *, batch_size):
    i = pl.program_id(0)
    mm_dtype = w1_ref.dtype  # bf16 by default; f32 if requested

    # ---- backbone: two Linear + ReLU layers (MXU matmuls, f32 accumulate) ----
    h = jnp.dot(x_ref[...].astype(mm_dtype), w1_ref[...],
                preferred_element_type=jnp.float32) + b1_ref[...]
    h = jnp.maximum(h, 0.0)
    h = jnp.dot(h.astype(mm_dtype), w2_ref[...],
                preferred_element_type=jnp.float32) + b2_ref[...]
    h = jnp.maximum(h, 0.0)

    # ---- head: logits + categorical NLL (no full log-softmax matrix) ----
    logits = jnp.dot(h.astype(mm_dtype), w3_ref[...],
                     preferred_element_type=jnp.float32) + b3_ref[...]

    m = jnp.max(logits, axis=-1, keepdims=True)
    lse = jnp.log(jnp.sum(jnp.exp(logits - m), axis=-1, keepdims=True)) + m

    tb, c_pad = logits.shape
    classes = jax.lax.broadcasted_iota(jnp.int32, (tb, c_pad), 1)
    # Select the true-class logit without materializing an f32 one-hot.
    picked = jnp.sum(jnp.where(classes == y_ref[...], logits, 0.0),
                     axis=-1, keepdims=True)

    rows = i * tb + jax.lax.broadcasted_iota(jnp.int32, (tb, 1), 0)
    valid = (rows < batch_size).astype(jnp.float32)     # mask padded batch rows
    block_sum = jnp.sum((lse - picked) * valid)

    # Lane-dense per-block partial sum (unmasked full-vreg store).
    out_ref[...] = jnp.full(out_ref.shape, block_sum, jnp.float32)


def pack_params(params, *, matmul_dtype=jnp.bfloat16):
    """Pad / cast params ONCE; store the result and reuse it for every call."""
    w1, b1, w2, b2, w3, b3 = params
    d_in, hidden = w1.shape
    n_classes = w3.shape[1]
    hp = _round_up(hidden, 128)
    cp = _round_up(n_classes, 128)

    w1p = jnp.zeros((d_in, hp), jnp.float32).at[:, :hidden].set(w1)
    w2p = jnp.zeros((hp, hp), jnp.float32).at[:hidden, :hidden].set(w2)
    w3p = jnp.zeros((hp, cp), jnp.float32).at[:hidden, :n_classes].set(w3)
    b1p = jnp.zeros((1, hp), jnp.float32).at[0, :hidden].set(b1.reshape(-1))
    b2p = jnp.zeros((1, hp), jnp.float32).at[0, :hidden].set(b2.reshape(-1))
    # Padded classes get a large-but-finite negative bias so they vanish from
    # the logsumexp exactly.  NOT -inf: 0 * inf would NaN in the picked-select.
    b3p = jnp.full((1, cp), -1e30, jnp.float32).at[0, :n_classes].set(b3.reshape(-1))

    # Weights in matmul dtype (bf16 halves resident VMEM + HBM bytes); biases
    # stay f32 (added after the f32-accumulated matmul).
    return (w1p.astype(matmul_dtype), b1p,
            w2p.astype(matmul_dtype), b2p,
            w3p.astype(matmul_dtype), b3p)


def simple_model_forward(x, y, packed_params, *, block_b=512):
    """Mean cross-entropy loss of SimpleModel; returns a f32 scalar."""
    w1p, b1p, w2p, b2p, w3p, b3p = packed_params
    B, d_in = x.shape
    hp = w1p.shape[1]
    cp = w3p.shape[1]

    # Batch tile: multiple of 8 sublanes, at most round_up(B, 8).
    TB = min(_round_up(block_b, 8), _round_up(B, 8))
    B_pad = _round_up(B, TB)
    n_blocks = B_pad // TB

    y = y.astype(jnp.int32).reshape(B, 1)
    if B_pad != B:
        # Ragged last block: the only case with wrapper-side copies.  Callers
        # should prefer B % TB == 0 so x / y stream to the kernel uncopied.
        x = jnp.zeros((B_pad, d_in), x.dtype).at[:B].set(x)
        y = jnp.zeros((B_pad, 1), jnp.int32).at[:B].set(y)

    kernel = functools.partial(_simple_model_kernel, batch_size=B)

    itemsize = jnp.dtype(w1p.dtype).itemsize
    w_bytes = (w1p.size + w2p.size + w3p.size) * itemsize
    b_bytes = (b1p.size + b2p.size + b3p.size) * 4
    flops = 2 * B_pad * (d_in * hp + hp * hp + hp * cp)
    bytes_accessed = (x.size * x.dtype.itemsize + y.size * 4
                      + w_bytes + b_bytes + n_blocks * 8 * 128 * 4)

    # VMEM budget: resident params (single-buffered) + double-buffered x/y/out
    # tiles + a handful of f32 activation temps, with 2x headroom.
    resident = w_bytes + b_bytes
    streamed = 2 * (TB * d_in * x.dtype.itemsize + TB * 128 * 4 + 8 * 128 * 4)
    acts = 6 * TB * max(hp, cp) * 4
    vmem_limit = int(min(100 << 20, max(8 << 20, 2 * (resident + streamed + acts))))

    def run(single_buffer_weights):
        if single_buffer_weights:
            # Constant index_map => nothing to prefetch; single-buffer halves
            # the resident-weight VMEM footprint.
            def res_spec(shape):
                return pl.BlockSpec(shape, lambda i: (0,) * len(shape),
                                    pipeline_mode=pl.Buffered(1))
        else:
            def res_spec(shape):
                return pl.BlockSpec(shape, lambda i: (0,) * len(shape))

        return pl.pallas_call(
            kernel,
            out_shape=jax.ShapeDtypeStruct((n_blocks, 8, 128), jnp.float32),
            grid=(n_blocks,),
            in_specs=[
                pl.BlockSpec((TB, d_in), lambda i: (i, 0)),   # x batch tile
                pl.BlockSpec((TB, 1), lambda i: (i, 0)),      # y batch tile
                res_spec((d_in, hp)), res_spec((1, hp)),      # layer 1 (resident)
                res_spec((hp, hp)), res_spec((1, hp)),        # layer 2 (resident)
                res_spec((hp, cp)), res_spec((1, cp)),        # head    (resident)
            ],
            out_specs=pl.BlockSpec((1, 8, 128), lambda i: (i, 0, 0)),
            compiler_params=pltpu.CompilerParams(
                dimension_semantics=("parallel",),  # batch blocks -> both TCs on v7x
                vmem_limit_bytes=vmem_limit),
            cost_estimate=pl.CostEstimate(
                flops=int(flops),
                transcendentals=int(B_pad * (cp + 1)),
                bytes_accessed=int(bytes_accessed)),
        )(x, y, w1p, b1p, w2p, b2p, w3p, b3p)

    try:
        partial_sums = run(single_buffer_weights=True)
    except Exception:
        # pipeline_mode=pl.Buffered(1) unsupported on this jax version: fall
        # back to default double-buffered resident weights (correct, more VMEM).
        partial_sums = run(single_buffer_weights=False)

    # Per-block partial sums -> mean NLL (outside the kernel: tiny, keeps the
    # grid axis embarrassingly parallel and avoids a serial SMEM accumulator).
    return jnp.sum(partial_sums[:, 0, 0]) / jnp.float32(B)


def init_params(key, d_in, hidden, n_classes):
    k1, k2, k3 = jax.random.split(key, 3)
    w1 = jax.random.normal(k1, (d_in, hidden), jnp.float32) * 0.1
    b1 = jnp.zeros((1, hidden), jnp.float32)
    w2 = jax.random.normal(k2, (hidden, hidden), jnp.float32) * 0.1
    b2 = jnp.zeros((1, hidden), jnp.float32)
    w3 = jax.random.normal(k3, (hidden, n_classes), jnp.float32) * 0.1
    b3 = jnp.zeros((1, n_classes), jnp.float32)
    return (w1, b1, w2, b2, w3, b3)


if __name__ == "__main__":
    B, D_IN, HIDDEN, N_CLASSES = 8, 32, 32, 16

    key = jax.random.PRNGKey(0)
    kx, ky, kp = jax.random.split(key, 3)

    x = jax.random.normal(kx, (B, D_IN), jnp.float32)
    y = jax.random.randint(ky, (B, 1), 0, N_CLASSES, dtype=jnp.int32)
    params = init_params(kp, D_IN, HIDDEN, N_CLASSES)

    # Pure-JAX reference of the same forward semantics.
    w1, b1, w2, b2, w3, b3 = params
    h = jnp.maximum(x @ w1 + b1, 0.0)
    h = jnp.maximum(h @ w2 + b2, 0.0)
    logits = h @ w3 + b3
    logp = jax.nn.log_softmax(logits, axis=-1)
    ref = -jnp.mean(jnp.take_along_axis(logp, y, axis=-1))

    # f32 matmul path: tight check.
    packed_f32 = pack_params(params, matmul_dtype=jnp.float32)
    loss_f32 = simple_model_forward(x, y, packed_f32)
    jax.block_until_ready(loss_f32)
    assert jnp.allclose(loss_f32, ref, atol=1e-5, rtol=1e-5), (loss_f32, ref)

    # bf16 matmul path (the default, for MXU-rate / byte wins): loose check.
    packed_bf16 = pack_params(params)  # matmul_dtype=jnp.bfloat16
    loss_bf16 = simple_model_forward(x, y, packed_bf16)
    jax.block_until_ready(loss_bf16)
    assert jnp.allclose(loss_bf16, ref, atol=5e-2, rtol=5e-2), (loss_bf16, ref)

    print("KERNEL_OK")
</pallas_src>

<mosaic_0001>
module attributes {stable_mosaic.version = 11 : i64} {
  func.func @_simple_model_kernel(%arg0: i32, %arg1: memref<8x32xf32, #tpu.memory_space<vmem>>, %arg2: memref<8x1xi32, #tpu.memory_space<vmem>>, %arg3: memref<32x128xf32, #tpu.memory_space<vmem>>, %arg4: memref<1x128xf32, #tpu.memory_space<vmem>>, %arg5: memref<128x128xf32, #tpu.memory_space<vmem>>, %arg6: memref<1x128xf32, #tpu.memory_space<vmem>>, %arg7: memref<128x128xf32, #tpu.memory_space<vmem>>, %arg8: memref<1x128xf32, #tpu.memory_space<vmem>>, %arg9: memref<1x8x128xf32, #tpu.memory_space<vmem>>) attributes {dimension_semantics = [#tpu.dimension_semantics<parallel>], iteration_bounds = array<i64: 1>, scalar_prefetch = 0 : i64, scratch_operands = 0 : i64, tpu.core_type = #tpu.core_type<tc>, window_params = [{transform_indices = @transform_0, window_bounds = array<i64: 8, 32>}, {transform_indices = @transform_1, window_bounds = array<i64: 8, 1>}, {pipeline_mode = #tpu.pipeline_mode<synchronous>, transform_indices = @transform_2, window_bounds = array<i64: 32, 128>}, {pipeline_mode = #tpu.pipeline_mode<synchronous>, transform_indices = @transform_3, window_bounds = array<i64: 1, 128>}, {pipeline_mode = #tpu.pipeline_mode<synchronous>, transform_indices = @transform_4, window_bounds = array<i64: 128, 128>}, {pipeline_mode = #tpu.pipeline_mode<synchronous>, transform_indices = @transform_5, window_bounds = array<i64: 1, 128>}, {pipeline_mode = #tpu.pipeline_mode<synchronous>, transform_indices = @transform_6, window_bounds = array<i64: 128, 128>}, {pipeline_mode = #tpu.pipeline_mode<synchronous>, transform_indices = @transform_7, window_bounds = array<i64: 1, 128>}, {transform_indices = @transform_8, window_bounds = array<i64: 1, 8, 128>}]} {
    %c0 = arith.constant 0 : index
    %c0_0 = arith.constant 0 : index
    %0 = vector.load %arg1[%c0, %c0_0] : memref<8x32xf32, #tpu.memory_space<vmem>>, vector<8x32xf32>
    %c0_1 = arith.constant 0 : index
    %c0_2 = arith.constant 0 : index
    %1 = vector.load %arg3[%c0_1, %c0_2] : memref<32x128xf32, #tpu.memory_space<vmem>>, vector<32x128xf32>
    %cst = arith.constant dense<0.000000e+00> : vector<8x128xf32>
    %2 = tpu.matmul %0, %1, %cst {dimension_numbers = #tpu.dot_dimension_numbers<[1], [0], [0], [1], [0, 0, 1, 1], [], []>} : vector<8x32xf32>, vector<32x128xf32>, vector<8x128xf32> -> vector<8x128xf32>
    %c0_3 = arith.constant 0 : index
    %c0_4 = arith.constant 0 : index
    %3 = vector.load %arg4[%c0_3, %c0_4] : memref<1x128xf32, #tpu.memory_space<vmem>>, vector<1x128xf32>
    %4 = vector.broadcast %3 : vector<1x128xf32> to vector<8x128xf32>
    %5 = arith.addf %2, %4 : vector<8x128xf32>
    %cst_5 = arith.constant 0.000000e+00 : f32
    %6 = vector.broadcast %cst_5 : f32 to vector<8x128xf32>
    %7 = arith.maximumf %5, %6 : vector<8x128xf32>
    %c0_6 = arith.constant 0 : index
    %c0_7 = arith.constant 0 : index
    %8 = vector.load %arg5[%c0_6, %c0_7] : memref<128x128xf32, #tpu.memory_space<vmem>>, vector<128x128xf32>
    %cst_8 = arith.constant dense<0.000000e+00> : vector<8x128xf32>
    %9 = tpu.matmul %7, %8, %cst_8 {dimension_numbers = #tpu.dot_dimension_numbers<[1], [0], [0], [1], [0, 0, 1, 1], [], []>} : vector<8x128xf32>, vector<128x128xf32>, vector<8x128xf32> -> vector<8x128xf32>
    %c0_9 = arith.constant 0 : index
    %c0_10 = arith.constant 0 : index
    %10 = vector.load %arg6[%c0_9, %c0_10] : memref<1x128xf32, #tpu.memory_space<vmem>>, vector<1x128xf32>
    %11 = vector.broadcast %10 : vector<1x128xf32> to vector<8x128xf32>
    %12 = arith.addf %9, %11 : vector<8x128xf32>
    %cst_11 = arith.constant 0.000000e+00 : f32
    %13 = vector.broadcast %cst_11 : f32 to vector<8x128xf32>
    %14 = arith.maximumf %12, %13 : vector<8x128xf32>
    %c0_12 = arith.constant 0 : index
    %c0_13 = arith.constant 0 : index
    %15 = vector.load %arg7[%c0_12, %c0_13] : memref<128x128xf32, #tpu.memory_space<vmem>>, vector<128x128xf32>
    %cst_14 = arith.constant dense<0.000000e+00> : vector<8x128xf32>
    %16 = tpu.matmul %14, %15, %cst_14 {dimension_numbers = #tpu.dot_dimension_numbers<[1], [0], [0], [1], [0, 0, 1, 1], [], []>} : vector<8x128xf32>, vector<128x128xf32>, vector<8x128xf32> -> vector<8x128xf32>
    %c0_15 = arith.constant 0 : index
    %c0_16 = arith.constant 0 : index
    %17 = vector.load %arg8[%c0_15, %c0_16] : memref<1x128xf32, #tpu.memory_space<vmem>>, vector<1x128xf32>
    %18 = vector.broadcast %17 : vector<1x128xf32> to vector<8x128xf32>
    %19 = arith.addf %16, %18 : vector<8x128xf32>
    %cst_17 = arith.constant dense<0xFF800000> : vector<8xf32>
    %20 = vector.multi_reduction <maximumf>, %19, %cst_17 [1] : vector<8x128xf32> to vector<8xf32>
    %21 = vector.shape_cast %20 : vector<8xf32> to vector<8x1xf32>
    %22 = vector.broadcast %21 : vector<8x1xf32> to vector<8x128xf32>
    %23 = arith.subf %19, %22 : vector<8x128xf32>
    %24 = math.exp %23 : vector<8x128xf32>
    %cst_18 = arith.constant dense<0.000000e+00> : vector<8xf32>
    %25 = vector.multi_reduction <add>, %24, %cst_18 [1] : vector<8x128xf32> to vector<8xf32>
    %26 = vector.shape_cast %25 : vector<8xf32> to vector<8x1xf32>
    %27 = math.log %26 : vector<8x1xf32>
    %28 = arith.addf %27, %21 : vector<8x1xf32>
    %29 = tpu.iota {dimensions = array<i32: 1>} : vector<8x128xi32>
    %c0_19 = arith.constant 0 : index
    %c0_20 = arith.constant 0 : index
    %30 = vector.load %arg2[%c0_19, %c0_20] : memref<8x1xi32, #tpu.memory_space<vmem>>, vector<8x1xi32>
    %31 = vector.broadcast %30 : vector<8x1xi32> to vector<8x128xi32>
    %32 = arith.cmpi eq, %29, %31 : vector<8x128xi32>
    %cst_21 = arith.constant 0.000000e+00 : f32
    %33 = vector.broadcast %cst_21 : f32 to vector<8x128xf32>
    %34 = arith.select %32, %19, %33 : vector<8x128xi1>, vector<8x128xf32>
    %cst_22 = arith.constant dense<0.000000e+00> : vector<8xf32>
    %35 = vector.multi_reduction <add>, %34, %cst_22 [1] : vector<8x128xf32> to vector<8xf32>
    %36 = vector.shape_cast %35 : vector<8xf32> to vector<8x1xf32>
    %c8_i32 = arith.constant 8 : i32
    %37 = arith.muli %arg0, %c8_i32 : i32
    %38 = tpu.iota {dimensions = array<i32: 0>} : vector<8x1xi32>
    %39 = vector.broadcast %37 : i32 to vector<8x1xi32>
    %40 = arith.addi %39, %38 : vector<8x1xi32>
    %c8_i32_23 = arith.constant 8 : i32
    %41 = vector.broadcast %c8_i32_23 : i32 to vector<8x1xi32>
    %42 = arith.cmpi slt, %40, %41 : vector<8x1xi32>
    %43 = arith.extui %42 : vector<8x1xi1> to vector<8x1xi32>
    %44 = arith.sitofp %43 : vector<8x1xi32> to vector<8x1xf32>
    %45 = arith.subf %28, %36 : vector<8x1xf32>
    %46 = arith.mulf %45, %44 : vector<8x1xf32>
    %47 = vector.shape_cast %46 : vector<8x1xf32> to vector<1x8x1xf32>
    %cst_24 = arith.constant dense<0.000000e+00> : vector<1xf32>
    %48 = vector.multi_reduction <add>, %47, %cst_24 [1, 2] : vector<1x8x1xf32> to vector<1xf32>
    %49 = vector.shape_cast %48 : vector<1xf32> to vector<1x1x1xf32>
    %50 = vector.extract %49[0, 0, 0] : f32 from vector<1x1x1xf32>
    %51 = vector.broadcast %50 : f32 to vector<1x8x128xf32>
    %c0_25 = arith.constant 0 : index
    %c0_26 = arith.constant 0 : index
    %c0_27 = arith.constant 0 : index
    %52 = vector.load %arg9[%c0_25, %c0_26, %c0_27] : memref<1x8x128xf32, #tpu.memory_space<vmem>>, vector<1x8x128xf32>
    tpu.vector_store %arg9[%c0_25, %c0_26, %c0_27], %51 {strides = array<i32>} : memref<1x8x128xf32, #tpu.memory_space<vmem>>, vector<1x8x128xf32>,
    return
  }
  func.func @transform_0(%arg0: i32) -> (i32, i32) {
    %c0_i32 = arith.constant 0 : i32
    %c0_i32_0 = arith.constant 0 : i32
    return %arg0, %c0_i32 : i32, i32
  }
  func.func @transform_1(%arg0: i32) -> (i32, i32) {
    %c0_i32 = arith.constant 0 : i32
    %c0_i32_0 = arith.constant 0 : i32
    return %arg0, %c0_i32 : i32, i32
  }
  func.func @transform_2(%arg0: i32) -> (i32, i32) {
    %c0_i32 = arith.constant 0 : i32
    %c0_i32_0 = arith.constant 0 : i32
    %c0_i32_1 = arith.constant 0 : i32
    return %c0_i32, %c0_i32_0 : i32, i32
  }
  func.func @transform_3(%arg0: i32) -> (i32, i32) {
    %c0_i32 = arith.constant 0 : i32
    %c0_i32_0 = arith.constant 0 : i32
    %c0_i32_1 = arith.constant 0 : i32
    return %c0_i32, %c0_i32_0 : i32, i32
  }
  func.func @transform_4(%arg0: i32) -> (i32, i32) {
    %c0_i32 = arith.constant 0 : i32
    %c0_i32_0 = arith.constant 0 : i32
    %c0_i32_1 = arith.constant 0 : i32
    return %c0_i32, %c0_i32_0 : i32, i32
  }
  func.func @transform_5(%arg0: i32) -> (i32, i32) {
    %c0_i32 = arith.constant 0 : i32
    %c0_i32_0 = arith.constant 0 : i32
    %c0_i32_1 = arith.constant 0 : i32
    return %c0_i32, %c0_i32_0 : i32, i32
  }
  func.func @transform_6(%arg0: i32) -> (i32, i32) {
    %c0_i32 = arith.constant 0 : i32
    %c0_i32_0 = arith.constant 0 : i32
    %c0_i32_1 = arith.constant 0 : i32
    return %c0_i32, %c0_i32_0 : i32, i32
  }
  func.func @transform_7(%arg0: i32) -> (i32, i32) {
    %c0_i32 = arith.constant 0 : i32
    %c0_i32_0 = arith.constant 0 : i32
    %c0_i32_1 = arith.constant 0 : i32
    return %c0_i32, %c0_i32_0 : i32, i32
  }
  func.func @transform_8(%arg0: i32) -> (i32, i32, i32) {
    %c0_i32 = arith.constant 0 : i32
    %c0_i32_0 = arith.constant 0 : i32
    %c0_i32_1 = arith.constant 0 : i32
    return %arg0, %c0_i32, %c0_i32_0 : i32, i32, i32
  }
}

module attributes {stable_mosaic.version = 11 : i64} {
  func.func @_simple_model_kernel(%arg0: i32, %arg1: memref<8x32xf32, #tpu.memory_space<vmem>>, %arg2: memref<8x1xi32, #tpu.memory_space<vmem>>, %arg3: memref<32x128xf32, #tpu.memory_space<vmem>>, %arg4: memref<1x128xf32, #tpu.memory_space<vmem>>, %arg5: memref<128x128xf32, #tpu.memory_space<vmem>>, %arg6: memref<1x128xf32, #tpu.memory_space<vmem>>, %arg7: memref<128x128xf32, #tpu.memory_space<vmem>>, %arg8: memref<1x128xf32, #tpu.memory_space<vmem>>, %arg9: memref<1x8x128xf32, #tpu.memory_space<vmem>>) attributes {dimension_semantics = [#tpu.dimension_semantics<parallel>], iteration_bounds = array<i64: 1>, scalar_prefetch = 0 : i64, scratch_operands = 0 : i64, tpu.core_type = #tpu.core_type<tc>, window_params = [{transform_indices = @transform_0, window_bounds = array<i64: 8, 32>}, {transform_indices = @transform_1, window_bounds = array<i64: 8, 1>}, {pipeline_mode = #tpu.pipeline_mode<synchronous>, transform_indices = @transform_2, window_bounds = array<i64: 32, 128>}, {pipeline_mode = #tpu.pipeline_mode<synchronous>, transform_indices = @transform_3, window_bounds = array<i64: 1, 128>}, {pipeline_mode = #tpu.pipeline_mode<synchronous>, transform_indices = @transform_4, window_bounds = array<i64: 128, 128>}, {pipeline_mode = #tpu.pipeline_mode<synchronous>, transform_indices = @transform_5, window_bounds = array<i64: 1, 128>}, {pipeline_mode = #tpu.pipeline_mode<synchronous>, transform_indices = @transform_6, window_bounds = array<i64: 128, 128>}, {pipeline_mode = #tpu.pipeline_mode<synchronous>, transform_indices = @transform_7, window_bounds = array<i64: 1, 128>}, {transform_indices = @transform_8, window_bounds = array<i64: 1, 8, 128>}]} {
    %c0 = arith.constant 0 : index
    %c0_0 = arith.constant 0 : index
    %0 = vector.load %arg1[%c0, %c0_0] : memref<8x32xf32, #tpu.memory_space<vmem>>, vector<8x32xf32>
    %c0_1 = arith.constant 0 : index
    %c0_2 = arith.constant 0 : index
    %1 = vector.load %arg3[%c0_1, %c0_2] : memref<32x128xf32, #tpu.memory_space<vmem>>, vector<32x128xf32>
    %cst = arith.constant dense<0.000000e+00> : vector<8x128xf32>
    %2 = tpu.matmul %0, %1, %cst {dimension_numbers = #tpu.dot_dimension_numbers<[1], [0], [0], [1], [0, 0, 1, 1], [], []>} : vector<8x32xf32>, vector<32x128xf32>, vector<8x128xf32> -> vector<8x128xf32>
    %c0_3 = arith.constant 0 : index
    %c0_4 = arith.constant 0 : index
    %3 = vector.load %arg4[%c0_3, %c0_4] : memref<1x128xf32, #tpu.memory_space<vmem>>, vector<1x128xf32>
    %4 = vector.broadcast %3 : vector<1x128xf32> to vector<8x128xf32>
    %5 = arith.addf %2, %4 : vector<8x128xf32>
    %cst_5 = arith.constant 0.000000e+00 : f32
    %6 = vector.broadcast %cst_5 : f32 to vector<8x128xf32>
    %7 = arith.maximumf %5, %6 : vector<8x128xf32>
    %c0_6 = arith.constant 0 : index
    %c0_7 = arith.constant 0 : index
    %8 = vector.load %arg5[%c0_6, %c0_7] : memref<128x128xf32, #tpu.memory_space<vmem>>, vector<128x128xf32>
    %cst_8 = arith.constant dense<0.000000e+00> : vector<8x128xf32>
    %9 = tpu.matmul %7, %8, %cst_8 {dimension_numbers = #tpu.dot_dimension_numbers<[1], [0], [0], [1], [0, 0, 1, 1], [], []>} : vector<8x128xf32>, vector<128x128xf32>, vector<8x128xf32> -> vector<8x128xf32>
    %c0_9 = arith.constant 0 : index
    %c0_10 = arith.constant 0 : index
    %10 = vector.load %arg6[%c0_9, %c0_10] : memref<1x128xf32, #tpu.memory_space<vmem>>, vector<1x128xf32>
    %11 = vector.broadcast %10 : vector<1x128xf32> to vector<8x128xf32>
    %12 = arith.addf %9, %11 : vector<8x128xf32>
    %cst_11 = arith.constant 0.000000e+00 : f32
    %13 = vector.broadcast %cst_11 : f32 to vector<8x128xf32>
    %14 = arith.maximumf %12, %13 : vector<8x128xf32>
    %c0_12 = arith.constant 0 : index
    %c0_13 = arith.constant 0 : index
    %15 = vector.load %arg7[%c0_12, %c0_13] : memref<128x128xf32, #tpu.memory_space<vmem>>, vector<128x128xf32>
    %cst_14 = arith.constant dense<0.000000e+00> : vector<8x128xf32>
    %16 = tpu.matmul %14, %15, %cst_14 {dimension_numbers = #tpu.dot_dimension_numbers<[1], [0], [0], [1], [0, 0, 1, 1], [], []>} : vector<8x128xf32>, vector<128x128xf32>, vector<8x128xf32> -> vector<8x128xf32>
    %c0_15 = arith.constant 0 : index
    %c0_16 = arith.constant 0 : index
    %17 = vector.load %arg8[%c0_15, %c0_16] : memref<1x128xf32, #tpu.memory_space<vmem>>, vector<1x128xf32>
    %18 = vector.broadcast %17 : vector<1x128xf32> to vector<8x128xf32>
    %19 = arith.addf %16, %18 : vector<8x128xf32>
    %cst_17 = arith.constant dense<0xFF800000> : vector<8xf32>
    %20 = vector.multi_reduction <maximumf>, %19, %cst_17 [1] : vector<8x128xf32> to vector<8xf32>
    %21 = vector.shape_cast %20 : vector<8xf32> to vector<8x1xf32>
    %22 = vector.broadcast %21 : vector<8x1xf32> to vector<8x128xf32>
    %23 = arith.subf %19, %22 : vector<8x128xf32>
    %24 = math.exp %23 : vector<8x128xf32>
    %cst_18 = arith.constant dense<0.000000e+00> : vector<8xf32>
    %25 = vector.multi_reduction <add>, %24, %cst_18 [1] : vector<8x128xf32> to vector<8xf32>
    %26 = vector.shape_cast %25 : vector<8xf32> to vector<8x1xf32>
    %27 = math.log %26 : vector<8x1xf32>
    %28 = arith.addf %27, %21 : vector<8x1xf32>
    %29 = tpu.iota {dimensions = array<i32: 1>} : vector<8x128xi32>
    %c0_19 = arith.constant 0 : index
    %c0_20 = arith.constant 0 : index
    %30 = vector.load %arg2[%c0_19, %c0_20] : memref<8x1xi32, #tpu.memory_space<vmem>>, vector<8x1xi32>
    %31 = vector.broadcast %30 : vector<8x1xi32> to vector<8x128xi32>
    %32 = arith.cmpi eq, %29, %31 : vector<8x128xi32>
    %cst_21 = arith.constant 0.000000e+00 : f32
    %33 = vector.broadcast %cst_21 : f32 to vector<8x128xf32>
    %34 = arith.select %32, %19, %33 : vector<8x128xi1>, vector<8x128xf32>
    %cst_22 = arith.constant dense<0.000000e+00> : vector<8xf32>
    %35 = vector.multi_reduction <add>, %34, %cst_22 [1] : vector<8x128xf32> to vector<8xf32>
    %36 = vector.shape_cast %35 : vector<8xf32> to vector<8x1xf32>
    %c8_i32 = arith.constant 8 : i32
    %37 = arith.muli %arg0, %c8_i32 : i32
    %38 = tpu.iota {dimensions = array<i32: 0>} : vector<8x1xi32>
    %39 = vector.broadcast %37 : i32 to vector<8x1xi32>
    %40 = arith.addi %39, %38 : vector<8x1xi32>
    %c8_i32_23 = arith.constant 8 : i32
    %41 = vector.broadcast %c8_i32_23 : i32 to vector<8x1xi32>
    %42 = arith.cmpi slt, %40, %41 : vector<8x1xi32>
    %43 = arith.extui %42 : vector<8x1xi1> to vector<8x1xi32>
    %44 = arith.sitofp %43 : vector<8x1xi32> to vector<8x1xf32>
    %45 = arith.subf %28, %36 : vector<8x1xf32>
    %46 = arith.mulf %45, %44 : vector<8x1xf32>
    %47 = vector.shape_cast %46 : vector<8x1xf32> to vector<1x8x1xf32>
    %cst_24 = arith.constant dense<0.000000e+00> : vector<1xf32>
    %48 = vector.multi_reduction <add>, %47, %cst_24 [1, 2] : vector<1x8x1xf32> to vector<1xf32>
    %49 = vector.shape_cast %48 : vector<1xf32> to vector<1x1x1xf32>
    %50 = vector.extract %49[0, 0, 0] : f32 from vector<1x1x1xf32>
    %51 = vector.broadcast %50 : f32 to vector<1x8x128xf32>
    %c0_25 = arith.constant 0 : index
    %c0_26 = arith.constant 0 : index
    %c0_27 = arith.constant 0 : index
    %52 = vector.load %arg9[%c0_25, %c0_26, %c0_27] : memref<1x8x128xf32, #tpu.memory_space<vmem>>, vector<1x8x128xf32>
    tpu.vector_store %arg9[%c0_25, %c0_26, %c0_27], %51 {strides = array<i32>} : memref<1x8x128xf32, #tpu.memory_space<vmem>>, vector<1x8x128xf32>,
    return
  }
  func.func @transform_0(%arg0: i32) -> (i32, i32) {
    %c0_i32 = arith.constant 0 : i32
    %c0_i32_0 = arith.constant 0 : i32
    return %arg0, %c0_i32 : i32, i32
  }
  func.func @transform_1(%arg0: i32) -> (i32, i32) {
    %c0_i32 = arith.constant 0 : i32
    %c0_i32_0 = arith.constant 0 : i32
    return %arg0, %c0_i32 : i32, i32
  }
  func.func @transform_2(%arg0: i32) -> (i32, i32) {
    %c0_i32 = arith.constant 0 : i32
    %c0_i32_0 = arith.constant 0 : i32
    %c0_i32_1 = arith.constant 0 : i32
    return %c0_i32, %c0_i32_0 : i32, i32
  }
  func.func @transform_3(%arg0: i32) -> (i32, i32) {
    %c0_i32 = arith.constant 0 : i32
    %c0_i32_0 = arith.constant 0 : i32
    %c0_i32_1 = arith.constant 0 : i32
    return %c0_i32, %c0_i32_0 : i32, i32
  }
  func.func @transform_4(%arg0: i32) -> (i32, i32) {
    %c0_i32 = arith.constant 0 : i32
    %c0_i32_0 = arith.constant 0 : i32
    %c0_i32_1 = arith.constant 0 : i32
    return %c0_i32, %c0_i32_0 : i32, i32
  }
  func.func @transform_5(%arg0: i32) -> (i32, i32) {
    %c0_i32 = arith.constant 0 : i32
    %c0_i32_0 = arith.constant 0 : i32
    %c0_i32_1 = arith.constant 0 : i32
    return %c0_i32, %c0_i32_0 : i32, i32
  }
  func.func @transform_6(%arg0: i32) -> (i32, i32) {
    %c0_i32 = arith.constant 0 : i32
    %c0_i32_0 = arith.constant 0 : i32
    %c0_i32_1 = arith.constant 0 : i32
    return %c0_i32, %c0_i32_0 : i32, i32
  }
  func.func @transform_7(%arg0: i32) -> (i32, i32) {
    %c0_i32 = arith.constant 0 : i32
    %c0_i32_0 = arith.constant 0 : i32
    %c0_i32_1 = arith.constant 0 : i32
    return %c0_i32, %c0_i32_0 : i32, i32
  }
  func.func @transform_8(%arg0: i32) -> (i32, i32, i32) {
    %c0_i32 = arith.constant 0 : i32
    %c0_i32_0 = arith.constant 0 : i32
    %c0_i32_1 = arith.constant 0 : i32
    return %arg0, %c0_i32, %c0_i32_0 : i32, i32, i32
  }
}

</mosaic_0001>

<llo_original>
// kernel: tpu_custom_call.1
$region0: #{tpu_custom_call.1}
  #allocation0 [shape = 'u32[]', space=smem, size = 0x4, offset = 0x4, fixed_abs, tag = 'smem constant byte address 0x4 - core index']
  #allocation1 [shape = 'u32[72,128]{1,0:T(1,128)}', space=vmem, size = 0x9000, scoped, tag = 'internal scratch']
  %s0 = inlined_call_operand.vmem [shape: f32[8,32], index: 0, kind: input, shape index: {}]
  %s1 = inlined_call_operand.vmem [shape: s32[8,1], index: 1, kind: input, shape index: {}]
  %s2 = inlined_call_operand.hbm [shape: f32[32,128], index: 2, kind: input, shape index: {}]
  %s3 = inlined_call_operand.vmem [shape: f32[1,128], index: 3, kind: input, shape index: {}]
  %s4 = inlined_call_operand.hbm [shape: f32[128,128], index: 4, kind: input, shape index: {}]
  %s5 = inlined_call_operand.vmem [shape: f32[1,128], index: 5, kind: input, shape index: {}]
  %s6 = inlined_call_operand.hbm [shape: f32[128,128], index: 6, kind: input, shape index: {}]
  %s7 = inlined_call_operand.vmem [shape: f32[1,128], index: 7, kind: input, shape index: {}]
  %s8 = inlined_call_operand.hbm [shape: f32[1,8,128], index: 8, kind: output, shape index: {}]
  %s9 = sld [smem:[#allocation0]]
  $region54: #{tpu_custom_call.1} parent=0
    _
  %s11 = ssub.s32 1, %s9
  %s12 = scalar_select 0, %s11, %s9
  $region1: #{tpu_custom_call.1} parent=0
    #allocation2 [shape = 'u8[16384]{0}', space=vmem, size = 0x4000, scoped, tag = 'input window, operand 2, single buffered']
    #allocation3 [shape = 's32[1]{0}', space=sflag, size = 0x4, scoped, tag = 'scoped memory for tpu_custom_call.1']
    #allocation4 [shape = 's32[1]{0}', space=sflag, size = 0x4, scoped, tag = 'scoped memory for tpu_custom_call.1']
    #allocation5 [shape = 'u8[65536]{0}', space=vmem, size = 0x10000, scoped, tag = 'input window, operand 4, single buffered']
    #allocation6 [shape = 's32[1]{0}', space=sflag, size = 0x4, scoped, tag = 'scoped memory for tpu_custom_call.1']
    #allocation7 [shape = 'u8[65536]{0}', space=vmem, size = 0x10000, scoped, tag = 'input window, operand 6, single buffered']
    #allocation8 [shape = 'u8[4096]{0}', space=vmem, size = 0x1000, scoped, tag = 'output window, operand 0, single buffered']
    %13 = vsyncpa [#allocation3], 0
    %14 = vsyncpa [#allocation6], 0
    %15 = vsyncpa [#allocation4], 0
    // Predicated region
    $region2: #{tpu_custom_call.1} parent=1 // pred_check
      _
    $region3: #{tpu_custom_call.1} parent=1 // pred_check_branch
      %17 = sbr.rel (0) target = $region5
    $region4: #{tpu_custom_call.1} parent=1 // pred_region
      _
    $region5: #{tpu_custom_call.1} parent=1 // pred_fallthru
      _
    // Predicated region
    $region6: #{tpu_custom_call.1} parent=1 // pred_check
      _
    $region7: #{tpu_custom_call.1} parent=1 // pred_check_branch
      %19 = sbr.rel (0) target = $region9
    $region8: #{tpu_custom_call.1} parent=1 // pred_region
      _
    $region9: #{tpu_custom_call.1} parent=1 // pred_fallthru
      _
    // Predicated region
    $region10: #{tpu_custom_call.1} parent=1 // pred_check
      _
    $region11: #{tpu_custom_call.1} parent=1 // pred_check_branch
      %21 = sbr.rel (0) target = $region13
    $region12: #{tpu_custom_call.1} parent=1 // pred_region
      %23 = vsyncadd [#allocation3], 0
      %s24 = sshll.u32 %s2, 4
      %s25 = int_to_ptr.hbm [resolvable:$true] %s24
      %s26 = sshll.u32 [#allocation2], 4
      %s27 = int_to_ptr.vmem [resolvable:$true] %s26
      %32 = dma.hbm_to_vmem [thread:$0]  %s25, 512, %s27, [#allocation3], 128, 128, 8
    $region13: #{tpu_custom_call.1} parent=1 // pred_fallthru
      _
    // Predicated region
    $region14: #{tpu_custom_call.1} parent=1 // pred_check
      _
    $region15: #{tpu_custom_call.1} parent=1 // pred_check_branch
      %34 = sbr.rel (0) target = $region17
    $region16: #{tpu_custom_call.1} parent=1 // pred_region
      _
    $region17: #{tpu_custom_call.1} parent=1 // pred_fallthru
      _
    // Predicated region
    $region18: #{tpu_custom_call.1} parent=1 // pred_check
      _
    $region19: #{tpu_custom_call.1} parent=1 // pred_check_branch
      %36 = sbr.rel (0) target = $region21
    $region20: #{tpu_custom_call.1} parent=1 // pred_region
      %38 = vsyncadd [#allocation6], 0
      %s39 = sshll.u32 %s4, 4
      %s40 = int_to_ptr.hbm [resolvable:$true] %s39
      %s41 = sshll.u32 [#allocation5], 4
      %s42 = int_to_ptr.vmem [resolvable:$true] %s41
      %47 = dma.hbm_to_vmem [thread:$0]  %s40, 2048, %s42, [#allocation6], 128, 128, 8
    $region21: #{tpu_custom_call.1} parent=1 // pred_fallthru
      _
    // Predicated region
    $region22: #{tpu_custom_call.1} parent=1 // pred_check
      _
    $region23: #{tpu_custom_call.1} parent=1 // pred_check_branch
      %49 = sbr.rel (0) target = $region25
    $region24: #{tpu_custom_call.1} parent=1 // pred_region
      _
    $region25: #{tpu_custom_call.1} parent=1 // pred_fallthru
      _
    // Predicated region
    $region26: #{tpu_custom_call.1} parent=1 // pred_check
      _
    $region27: #{tpu_custom_call.1} parent=1 // pred_check_branch
      %51 = sbr.rel (0) target = $region29
    $region28: #{tpu_custom_call.1} parent=1 // pred_region
      %53 = vsyncadd [#allocation6], 0
      %s54 = sshll.u32 %s6, 4
      %s55 = int_to_ptr.hbm [resolvable:$true] %s54
      %s56 = sshll.u32 [#allocation7], 4
      %s57 = int_to_ptr.vmem [resolvable:$true] %s56
      %62 = dma.hbm_to_vmem [thread:$0]  %s55, 2048, %s57, [#allocation6], 128, 128, 8
    $region29: #{tpu_custom_call.1} parent=1 // pred_fallthru
      _
    // Predicated region
    $region30: #{tpu_custom_call.1} parent=1 // pred_check
      _
    $region31: #{tpu_custom_call.1} parent=1 // pred_check_branch
      %64 = sbr.rel (0) target = $region33
    $region32: #{tpu_custom_call.1} parent=1 // pred_region
      _
    $region33: #{tpu_custom_call.1} parent=1 // pred_fallthru
      _
    // Predicated region
    $region34: #{tpu_custom_call.1} parent=1 // pred_check
      _
    $region35: #{tpu_custom_call.1} parent=1 // pred_check_branch
      %66 = sbr.rel (0) target = $region37
    $region36: #{tpu_custom_call.1} parent=1 // pred_region
      %68 = dma.done [#allocation3], 512
    $region37: #{tpu_custom_call.1} parent=1 // pred_fallthru
      _
    // Predicated region
    $region38: #{tpu_custom_call.1} parent=1 // pred_check
      _
    $region39: #{tpu_custom_call.1} parent=1 // pred_check_branch
      %70 = sbr.rel (0) target = $region41
    $region40: #{tpu_custom_call.1} parent=1 // pred_region
      %72 = dma.done [#allocation6], 2048
    $region41: #{tpu_custom_call.1} parent=1 // pred_fallthru
      _
    // Predicated region
    $region42: #{tpu_custom_call.1} parent=1 // pred_check
      _
    $region43: #{tpu_custom_call.1} parent=1 // pred_check_branch
      %74 = sbr.rel (0) target = $region45
    $region44: #{tpu_custom_call.1} parent=1 // pred_region
      %76 = dma.done [#allocation6], 2048
    $region45: #{tpu_custom_call.1} parent=1 // pred_fallthru
      _
    %v77 = vld [vmem:[%s0] sm:$0xff]
    %v78 = vld [vmem:[#allocation2] sm:$0xff]
    %v79 = vld [vmem:[#allocation2 + $0x8] sm:$0xff]
    %v80 = vld [vmem:[#allocation2 + $0x10] sm:$0xff]
    %v81 = vld [vmem:[#allocation2 + $0x18] sm:$0xff]
    %v82 = vld [vmem:[%s3] sm:$0x1]
    %v84 = vperm.slane %v82, 0
    %vm86 = vcmask 261120
    %v88 = vsel %vm86, %v77, 0
    %90 = vmatpush.msra.mxu0 0.0
    %91 = vmatpush.msra.mxu0 0.0
    %92 = vmatpush.msra.mxu0 0.0
    %93 = vmatpush.msra.mxu0 0.0
    %94 = vmatpush.msra.mxu0 0.0
    %95 = vmatpush.msra.mxu0 0.0
    %96 = vmatpush.msra.mxu0 0.0
    %97 = vmatpush.msra.mxu0 0.0
    %98 = vmatpush.msra.mxu0 0.0
    %99 = vmatpush.msra.mxu0 0.0
    %100 = vmatpush.msra.mxu0 0.0
    %101 = vmatpush.msra.mxu0 0.0
    %102 = vmatpush.msra.mxu0 %v81
    %103 = vmatpush.msra.mxu0 %v80
    %104 = vmatpush.msra.mxu0 %v79
    %105 = vmatpush.msra.mxu0 %v78
    %106 = vmatmul.f32.gmra.mxu0 %v88
    %v107 = vpop.f32.mrf.mxu0
    %v108 = vadd.f32 %v84, %v107
    %109 = vdwg.mxu0
    %v110 = vmax.f32 %v108, 0.0
    %v111 = vld [vmem:[#allocation5] sm:$0xff]
    %v112 = vld [vmem:[#allocation5 + $0x8] sm:$0xff]
    %v113 = vld [vmem:[#allocation5 + $0x10] sm:$0xff]
    %v114 = vld [vmem:[#allocation5 + $0x18] sm:$0xff]
    %v115 = vld [vmem:[#allocation5 + $0x20] sm:$0xff]
    %v116 = vld [vmem:[#allocation5 + $0x28] sm:$0xff]
    %v117 = vld [vmem:[#allocation5 + $0x30] sm:$0xff]
    %v118 = vld [vmem:[#allocation5 + $0x38] sm:$0xff]
    %v119 = vld [vmem:[#allocation5 + $0x40] sm:$0xff]
    %v120 = vld [vmem:[#allocation5 + $0x48] sm:$0xff]
    %v121 = vld [vmem:[#allocation5 + $0x50] sm:$0xff]
    %v122 = vld [vmem:[#allocation5 + $0x58] sm:$0xff]
    %v123 = vld [vmem:[#allocation5 + $0x60] sm:$0xff]
    %v124 = vld [vmem:[#allocation5 + $0x68] sm:$0xff]
    %v125 = vld [vmem:[#allocation5 + $0x70] sm:$0xff]
    %v126 = vld [vmem:[#allocation5 + $0x78] sm:$0xff]
    %v127 = vld [vmem:[%s5] sm:$0x1]
    %v129 = vperm.slane %v127, 0
    %131 = vmatpush.msra.mxu0 %v126
    %132 = vmatpush.msra.mxu0 %v125
    %133 = vmatpush.msra.mxu0 %v124
    %134 = vmatpush.msra.mxu0 %v123
    %135 = vmatpush.msra.mxu0 %v122
    %136 = vmatpush.msra.mxu0 %v121
    %137 = vmatpush.msra.mxu0 %v120
    %138 = vmatpush.msra.mxu0 %v119
    %139 = vmatpush.msra.mxu0 %v118
    %140 = vmatpush.msra.mxu0 %v117
    %141 = vmatpush.msra.mxu0 %v116
    %142 = vmatpush.msra.mxu0 %v115
    %143 = vmatpush.msra.mxu0 %v114
    %144 = vmatpush.msra.mxu0 %v113
    %145 = vmatpush.msra.mxu0 %v112
    %146 = vmatpush.msra.mxu0 %v111
    %147 = vmatmul.f32.gmra.mxu0 %v110
    %v148 = vpop.f32.mrf.mxu0
    %v149 = vadd.f32 %v129, %v148
    %150 = vdwg.mxu0
    %v151 = vmax.f32 %v149, 0.0
    %v152 = vld [vmem:[#allocation7] sm:$0xff]
    %v153 = vld [vmem:[#allocation7 + $0x8] sm:$0xff]
    %v154 = vld [vmem:[#allocation7 + $0x10] sm:$0xff]
    %v155 = vld [vmem:[#allocation7 + $0x18] sm:$0xff]
    %v156 = vld [vmem:[#allocation7 + $0x20] sm:$0xff]
    %v157 = vld [vmem:[#allocation7 + $0x28] sm:$0xff]
    %v158 = vld [vmem:[#allocation7 + $0x30] sm:$0xff]
    %v159 = vld [vmem:[#allocation7 + $0x38] sm:$0xff]
    %v160 = vld [vmem:[#allocation7 + $0x40] sm:$0xff]
    %v161 = vld [vmem:[#allocation7 + $0x48] sm:$0xff]
    %v162 = vld [vmem:[#allocation7 + $0x50] sm:$0xff]
    %v163 = vld [vmem:[#allocation7 + $0x58] sm:$0xff]
    %v164 = vld [vmem:[#allocation7 + $0x60] sm:$0xff]
    %v165 = vld [vmem:[#allocation7 + $0x68] sm:$0xff]
    %v166 = vld [vmem:[#allocation7 + $0x70] sm:$0xff]
    %v167 = vld [vmem:[#allocation7 + $0x78] sm:$0xff]
    %v168 = vld [vmem:[%s7] sm:$0x1]
    %v170 = vperm.slane %v168, 0
    %172 = vmatpush.msra.mxu0 %v167
    %173 = vmatpush.msra.mxu0 %v166
    %174 = vmatpush.msra.mxu0 %v165
    %175 = vmatpush.msra.mxu0 %v164
    %176 = vmatpush.msra.mxu0 %v163
    %177 = vmatpush.msra.mxu0 %v162
    %178 = vmatpush.msra.mxu0 %v161
    %179 = vmatpush.msra.mxu0 %v160
    %180 = vmatpush.msra.mxu0 %v159
    %181 = vmatpush.msra.mxu0 %v158
    %182 = vmatpush.msra.mxu0 %v157
    %183 = vmatpush.msra.mxu0 %v156
    %184 = vmatpush.msra.mxu0 %v155
    %185 = vmatpush.msra.mxu0 %v154
    %186 = vmatpush.msra.mxu0 %v153
    %187 = vmatpush.msra.mxu0 %v152
    %188 = vmatmul.f32.gmra.mxu0 %v151
    %v189 = vpop.f32.mrf.mxu0
    %v190 = vadd.f32 %v170, %v189
    %191 = vdwg.mxu0
    %192 = vmax.xlane.f32.xlu0 %v190
    %v193 = vpop.xlane.xlu0 %192
    %v194 = vsub.f32 %v190, %v193
    %v195 = vmul.f32 %v194, 1.442695
    %v196 = vpow.pop %v195
    %197 = vadd.xlane.f32.xlu0 %v196
    %v198 = vpop.xlane.xlu0 %197
    %v199 = vlog2.pop %v198
    %v200 = vmul.f32 %v199, 0.6931472
    %v201 = vadd.f32 %v200, %v193
    %v202 = vlaneseq
    %v203 = vand.u32 %v202, 127
    %v204 = vld [vmem:[%s1] sm:$0xff]
    %205 = vset.pattern.permute.xlu0 0
    %206 = vperm.xlu0 %205, %v204
    %v207 = vpop.permute.xlu0 %206
    %vm208 = vcmp.eq.s32.totalorder %v203, %v207
    %v209 = vsel %vm208, %v190, 0.0
    %210 = vadd.xlane.f32.xlu0 %v209
    %v211 = vpop.xlane.xlu0 %210
    %s212 = smul.u32 0, 8
    %v213 = vlaneseq
    %v214 = vshrl.u32 %v213, 7
    %v215 = vstv %s212
    %v216 = vadd.s32 %v215, %v214
    %vm217 = vcmp.lt.s32.totalorder %v216, 8
    %v218 = vsel %vm217, 1, 0
    %v219 = vcvt.s32.f32 %v218
    %v220 = vsub.f32 %v201, %v211
    %v221 = vmul.f32 %v220, %v219
    %vm222 = vcmask 7168
    %v223 = vsel %vm222, %v221, 0.0
    %224 = vadd.xlane.f32.xlu0 %v223
    %v225 = vpop.xlane.xlu0 %224
    %v226 = vrot.slane %v225, 4
    %v227 = vadd.f32 %v225, %v226
    %v228 = vrot.slane %v227, 2
    %v229 = vadd.f32 %v227, %v228
    %v230 = vrot.slane %v229, 1
    %v231 = vadd.f32 %v229, %v230
    %s232 = vtos %v231
    %v233 = vstv %s232
    %234 = vst [vmem:[#allocation8] sm:$0xff] %v233
    // Predicated region
    $region46: #{tpu_custom_call.1} parent=1 // pred_check
      _
    $region47: #{tpu_custom_call.1} parent=1 // pred_check_branch
      %236 = sbr.rel (0) target = $region49
    $region48: #{tpu_custom_call.1} parent=1 // pred_region
      %238 = vsyncadd [#allocation4], 0
      %s240 = sshll.u32 [#allocation8], 4
      %s241 = int_to_ptr.vmem [resolvable:$true] %s240
      %s242 = sshll.u32 %s8, 4
      %s243 = int_to_ptr.hbm [resolvable:$true] %s242
      %245 = dma.vmem_to_hbm [thread:$0]  %s241, 128, %s243, [#allocation4]
    $region49: #{tpu_custom_call.1} parent=1 // pred_fallthru
      _
    // Predicated region
    $region50: #{tpu_custom_call.1} parent=1 // pred_check
      _
    $region51: #{tpu_custom_call.1} parent=1 // pred_check_branch
      %247 = sbr.rel (0) target = $region53
    $region52: #{tpu_custom_call.1} parent=1 // pred_region
      %249 = dma.done [#allocation4], 128
    $region53: #{tpu_custom_call.1} parent=1 // pred_fallthru
      _
    %250 = vsyncpa [#allocation3], 1
    %251 = vsyncpa [#allocation6], 1
    %252 = vsyncpa [#allocation4], 1

// kernel: tpu_custom_call.1
$region0: #{tpu_custom_call.1}
  #allocation0 [shape = 'u32[]', space=smem, size = 0x4, offset = 0x4, fixed_abs, tag = 'smem constant byte address 0x4 - core index']
  #allocation1 [shape = 'u32[72,128]{1,0:T(1,128)}', space=vmem, size = 0x9000, scoped, tag = 'internal scratch']
  %s0 = inlined_call_operand.vmem [shape: f32[8,32], index: 0, kind: input, shape index: {}]
  %s1 = inlined_call_operand.vmem [shape: s32[8,1], index: 1, kind: input, shape index: {}]
  %s2 = inlined_call_operand.hbm [shape: f32[32,128], index: 2, kind: input, shape index: {}]
  %s3 = inlined_call_operand.vmem [shape: f32[1,128], index: 3, kind: input, shape index: {}]
  %s4 = inlined_call_operand.hbm [shape: f32[128,128], index: 4, kind: input, shape index: {}]
  %s5 = inlined_call_operand.vmem [shape: f32[1,128], index: 5, kind: input, shape index: {}]
  %s6 = inlined_call_operand.hbm [shape: f32[128,128], index: 6, kind: input, shape index: {}]
  %s7 = inlined_call_operand.vmem [shape: f32[1,128], index: 7, kind: input, shape index: {}]
  %s8 = inlined_call_operand.hbm [shape: f32[1,8,128], index: 8, kind: output, shape index: {}]
  %s9 = sld [smem:[#allocation0]]
  $region54: #{tpu_custom_call.1} parent=0
    _
  %s11 = ssub.s32 1, %s9
  %s12 = scalar_select 0, %s11, %s9
  $region1: #{tpu_custom_call.1} parent=0
    #allocation2 [shape = 'u8[16384]{0}', space=vmem, size = 0x4000, scoped, tag = 'input window, operand 2, single buffered']
    #allocation3 [shape = 's32[1]{0}', space=sflag, size = 0x4, scoped, tag = 'scoped memory for tpu_custom_call.1']
    #allocation4 [shape = 's32[1]{0}', space=sflag, size = 0x4, scoped, tag = 'scoped memory for tpu_custom_call.1']
    #allocation5 [shape = 'u8[65536]{0}', space=vmem, size = 0x10000, scoped, tag = 'input window, operand 4, single buffered']
    #allocation6 [shape = 's32[1]{0}', space=sflag, size = 0x4, scoped, tag = 'scoped memory for tpu_custom_call.1']
    #allocation7 [shape = 'u8[65536]{0}', space=vmem, size = 0x10000, scoped, tag = 'input window, operand 6, single buffered']
    #allocation8 [shape = 'u8[4096]{0}', space=vmem, size = 0x1000, scoped, tag = 'output window, operand 0, single buffered']
    %13 = vsyncpa [#allocation3], 0
    %14 = vsyncpa [#allocation6], 0
    %15 = vsyncpa [#allocation4], 0
    // Predicated region
    $region2: #{tpu_custom_call.1} parent=1 // pred_check
      _
    $region3: #{tpu_custom_call.1} parent=1 // pred_check_branch
      %17 = sbr.rel (0) target = $region5
    $region4: #{tpu_custom_call.1} parent=1 // pred_region
      _
    $region5: #{tpu_custom_call.1} parent=1 // pred_fallthru
      _
    // Predicated region
    $region6: #{tpu_custom_call.1} parent=1 // pred_check
      _
    $region7: #{tpu_custom_call.1} parent=1 // pred_check_branch
      %19 = sbr.rel (0) target = $region9
    $region8: #{tpu_custom_call.1} parent=1 // pred_region
      _
    $region9: #{tpu_custom_call.1} parent=1 // pred_fallthru
      _
    // Predicated region
    $region10: #{tpu_custom_call.1} parent=1 // pred_check
      _
    $region11: #{tpu_custom_call.1} parent=1 // pred_check_branch
      %21 = sbr.rel (0) target = $region13
    $region12: #{tpu_custom_call.1} parent=1 // pred_region
      %23 = vsyncadd [#allocation3], 0
      %s24 = sshll.u32 %s2, 4
      %s25 = int_to_ptr.hbm [resolvable:$true] %s24
      %s26 = sshll.u32 [#allocation2], 4
      %s27 = int_to_ptr.vmem [resolvable:$true] %s26
      %32 = dma.hbm_to_vmem [thread:$0]  %s25, 512, %s27, [#allocation3], 128, 128, 8
    $region13: #{tpu_custom_call.1} parent=1 // pred_fallthru
      _
    // Predicated region
    $region14: #{tpu_custom_call.1} parent=1 // pred_check
      _
    $region15: #{tpu_custom_call.1} parent=1 // pred_check_branch
      %34 = sbr.rel (0) target = $region17
    $region16: #{tpu_custom_call.1} parent=1 // pred_region
      _
    $region17: #{tpu_custom_call.1} parent=1 // pred_fallthru
      _
    // Predicated region
    $region18: #{tpu_custom_call.1} parent=1 // pred_check
      _
    $region19: #{tpu_custom_call.1} parent=1 // pred_check_branch
      %36 = sbr.rel (0) target = $region21
    $region20: #{tpu_custom_call.1} parent=1 // pred_region
      %38 = vsyncadd [#allocation6], 0
      %s39 = sshll.u32 %s4, 4
      %s40 = int_to_ptr.hbm [resolvable:$true] %s39
      %s41 = sshll.u32 [#allocation5], 4
      %s42 = int_to_ptr.vmem [resolvable:$true] %s41
      %47 = dma.hbm_to_vmem [thread:$0]  %s40, 2048, %s42, [#allocation6], 128, 128, 8
    $region21: #{tpu_custom_call.1} parent=1 // pred_fallthru
      _
    // Predicated region
    $region22: #{tpu_custom_call.1} parent=1 // pred_check
      _
    $region23: #{tpu_custom_call.1} parent=1 // pred_check_branch
      %49 = sbr.rel (0) target = $region25
    $region24: #{tpu_custom_call.1} parent=1 // pred_region
      _
    $region25: #{tpu_custom_call.1} parent=1 // pred_fallthru
      _
    // Predicated region
    $region26: #{tpu_custom_call.1} parent=1 // pred_check
      _
    $region27: #{tpu_custom_call.1} parent=1 // pred_check_branch
      %51 = sbr.rel (0) target = $region29
    $region28: #{tpu_custom_call.1} parent=1 // pred_region
      %53 = vsyncadd [#allocation6], 0
      %s54 = sshll.u32 %s6, 4
      %s55 = int_to_ptr.hbm [resolvable:$true] %s54
      %s56 = sshll.u32 [#allocation7], 4
      %s57 = int_to_ptr.vmem [resolvable:$true] %s56
      %62 = dma.hbm_to_vmem [thread:$0]  %s55, 2048, %s57, [#allocation6], 128, 128, 8
    $region29: #{tpu_custom_call.1} parent=1 // pred_fallthru
      _
    // Predicated region
    $region30: #{tpu_custom_call.1} parent=1 // pred_check
      _
    $region31: #{tpu_custom_call.1} parent=1 // pred_check_branch
      %64 = sbr.rel (0) target = $region33
    $region32: #{tpu_custom_call.1} parent=1 // pred_region
      _
    $region33: #{tpu_custom_call.1} parent=1 // pred_fallthru
      _
    // Predicated region
    $region34: #{tpu_custom_call.1} parent=1 // pred_check
      _
    $region35: #{tpu_custom_call.1} parent=1 // pred_check_branch
      %66 = sbr.rel (0) target = $region37
    $region36: #{tpu_custom_call.1} parent=1 // pred_region
      %68 = dma.done [#allocation3], 512
    $region37: #{tpu_custom_call.1} parent=1 // pred_fallthru
      _
    // Predicated region
    $region38: #{tpu_custom_call.1} parent=1 // pred_check
      _
    $region39: #{tpu_custom_call.1} parent=1 // pred_check_branch
      %70 = sbr.rel (0) target = $region41
    $region40: #{tpu_custom_call.1} parent=1 // pred_region
      %72 = dma.done [#allocation6], 2048
    $region41: #{tpu_custom_call.1} parent=1 // pred_fallthru
      _
    // Predicated region
    $region42: #{tpu_custom_call.1} parent=1 // pred_check
      _
    $region43: #{tpu_custom_call.1} parent=1 // pred_check_branch
      %74 = sbr.rel (0) target = $region45
    $region44: #{tpu_custom_call.1} parent=1 // pred_region
      %76 = dma.done [#allocation6], 2048
    $region45: #{tpu_custom_call.1} parent=1 // pred_fallthru
      _
    %v77 = vld [vmem:[%s0] sm:$0xff]
    %v78 = vld [vmem:[#allocation2] sm:$0xff]
    %v79 = vld [vmem:[#allocation2 + $0x8] sm:$0xff]
    %v80 = vld [vmem:[#allocation2 + $0x10] sm:$0xff]
    %v81 = vld [vmem:[#allocation2 + $0x18] sm:$0xff]
    %v82 = vld [vmem:[%s3] sm:$0x1]
    %v84 = vperm.slane %v82, 0
    %vm86 = vcmask 261120
    %v88 = vsel %vm86, %v77, 0
    %90 = vmatpush.msra.mxu0 0.0
    %91 = vmatpush.msra.mxu0 0.0
    %92 = vmatpush.msra.mxu0 0.0
    %93 = vmatpush.msra.mxu0 0.0
    %94 = vmatpush.msra.mxu0 0.0
    %95 = vmatpush.msra.mxu0 0.0
    %96 = vmatpush.msra.mxu0 0.0
    %97 = vmatpush.msra.mxu0 0.0
    %98 = vmatpush.msra.mxu0 0.0
    %99 = vmatpush.msra.mxu0 0.0
    %100 = vmatpush.msra.mxu0 0.0
    %101 = vmatpush.msra.mxu0 0.0
    %102 = vmatpush.msra.mxu0 %v81
    %103 = vmatpush.msra.mxu0 %v80
    %104 = vmatpush.msra.mxu0 %v79
    %105 = vmatpush.msra.mxu0 %v78
    %106 = vmatmul.f32.gmra.mxu0 %v88
    %v107 = vpop.f32.mrf.mxu0
    %v108 = vadd.f32 %v84, %v107
    %109 = vdwg.mxu0
    %v110 = vmax.f32 %v108, 0.0
    %v111 = vld [vmem:[#allocation5] sm:$0xff]
    %v112 = vld [vmem:[#allocation5 + $0x8] sm:$0xff]
    %v113 = vld [vmem:[#allocation5 + $0x10] sm:$0xff]
    %v114 = vld [vmem:[#allocation5 + $0x18] sm:$0xff]
    %v115 = vld [vmem:[#allocation5 + $0x20] sm:$0xff]
    %v116 = vld [vmem:[#allocation5 + $0x28] sm:$0xff]
    %v117 = vld [vmem:[#allocation5 + $0x30] sm:$0xff]
    %v118 = vld [vmem:[#allocation5 + $0x38] sm:$0xff]
    %v119 = vld [vmem:[#allocation5 + $0x40] sm:$0xff]
    %v120 = vld [vmem:[#allocation5 + $0x48] sm:$0xff]
    %v121 = vld [vmem:[#allocation5 + $0x50] sm:$0xff]
    %v122 = vld [vmem:[#allocation5 + $0x58] sm:$0xff]
    %v123 = vld [vmem:[#allocation5 + $0x60] sm:$0xff]
    %v124 = vld [vmem:[#allocation5 + $0x68] sm:$0xff]
    %v125 = vld [vmem:[#allocation5 + $0x70] sm:$0xff]
    %v126 = vld [vmem:[#allocation5 + $0x78] sm:$0xff]
    %v127 = vld [vmem:[%s5] sm:$0x1]
    %v129 = vperm.slane %v127, 0
    %131 = vmatpush.msra.mxu0 %v126
    %132 = vmatpush.msra.mxu0 %v125
    %133 = vmatpush.msra.mxu0 %v124
    %134 = vmatpush.msra.mxu0 %v123
    %135 = vmatpush.msra.mxu0 %v122
    %136 = vmatpush.msra.mxu0 %v121
    %137 = vmatpush.msra.mxu0 %v120
    %138 = vmatpush.msra.mxu0 %v119
    %139 = vmatpush.msra.mxu0 %v118
    %140 = vmatpush.msra.mxu0 %v117
    %141 = vmatpush.msra.mxu0 %v116
    %142 = vmatpush.msra.mxu0 %v115
    %143 = vmatpush.msra.mxu0 %v114
    %144 = vmatpush.msra.mxu0 %v113
    %145 = vmatpush.msra.mxu0 %v112
    %146 = vmatpush.msra.mxu0 %v111
    %147 = vmatmul.f32.gmra.mxu0 %v110
    %v148 = vpop.f32.mrf.mxu0
    %v149 = vadd.f32 %v129, %v148
    %150 = vdwg.mxu0
    %v151 = vmax.f32 %v149, 0.0
    %v152 = vld [vmem:[#allocation7] sm:$0xff]
    %v153 = vld [vmem:[#allocation7 + $0x8] sm:$0xff]
    %v154 = vld [vmem:[#allocation7 + $0x10] sm:$0xff]
    %v155 = vld [vmem:[#allocation7 + $0x18] sm:$0xff]
    %v156 = vld [vmem:[#allocation7 + $0x20] sm:$0xff]
    %v157 = vld [vmem:[#allocation7 + $0x28] sm:$0xff]
    %v158 = vld [vmem:[#allocation7 + $0x30] sm:$0xff]
    %v159 = vld [vmem:[#allocation7 + $0x38] sm:$0xff]
    %v160 = vld [vmem:[#allocation7 + $0x40] sm:$0xff]
    %v161 = vld [vmem:[#allocation7 + $0x48] sm:$0xff]
    %v162 = vld [vmem:[#allocation7 + $0x50] sm:$0xff]
    %v163 = vld [vmem:[#allocation7 + $0x58] sm:$0xff]
    %v164 = vld [vmem:[#allocation7 + $0x60] sm:$0xff]
    %v165 = vld [vmem:[#allocation7 + $0x68] sm:$0xff]
    %v166 = vld [vmem:[#allocation7 + $0x70] sm:$0xff]
    %v167 = vld [vmem:[#allocation7 + $0x78] sm:$0xff]
    %v168 = vld [vmem:[%s7] sm:$0x1]
    %v170 = vperm.slane %v168, 0
    %172 = vmatpush.msra.mxu0 %v167
    %173 = vmatpush.msra.mxu0 %v166
    %174 = vmatpush.msra.mxu0 %v165
    %175 = vmatpush.msra.mxu0 %v164
    %176 = vmatpush.msra.mxu0 %v163
    %177 = vmatpush.msra.mxu0 %v162
    %178 = vmatpush.msra.mxu0 %v161
    %179 = vmatpush.msra.mxu0 %v160
    %180 = vmatpush.msra.mxu0 %v159
    %181 = vmatpush.msra.mxu0 %v158
    %182 = vmatpush.msra.mxu0 %v157
    %183 = vmatpush.msra.mxu0 %v156
    %184 = vmatpush.msra.mxu0 %v155
    %185 = vmatpush.msra.mxu0 %v154
    %186 = vmatpush.msra.mxu0 %v153
    %187 = vmatpush.msra.mxu0 %v152
    %188 = vmatmul.f32.gmra.mxu0 %v151
    %v189 = vpop.f32.mrf.mxu0
    %v190 = vadd.f32 %v170, %v189
    %191 = vdwg.mxu0
    %192 = vmax.xlane.f32.xlu0 %v190
    %v193 = vpop.xlane.xlu0 %192
    %v194 = vsub.f32 %v190, %v193
    %v195 = vmul.f32 %v194, 1.442695
    %v196 = vpow.pop %v195
    %197 = vadd.xlane.f32.xlu0 %v196
    %v198 = vpop.xlane.xlu0 %197
    %v199 = vlog2.pop %v198
    %v200 = vmul.f32 %v199, 0.6931472
    %v201 = vadd.f32 %v200, %v193
    %v202 = vlaneseq
    %v203 = vand.u32 %v202, 127
    %v204 = vld [vmem:[%s1] sm:$0xff]
    %205 = vset.pattern.permute.xlu0 0
    %206 = vperm.xlu0 %205, %v204
    %v207 = vpop.permute.xlu0 %206
    %vm208 = vcmp.eq.s32.totalorder %v203, %v207
    %v209 = vsel %vm208, %v190, 0.0
    %210 = vadd.xlane.f32.xlu0 %v209
    %v211 = vpop.xlane.xlu0 %210
    %s212 = smul.u32 0, 8
    %v213 = vlaneseq
    %v214 = vshrl.u32 %v213, 7
    %v215 = vstv %s212
    %v216 = vadd.s32 %v215, %v214
    %vm217 = vcmp.lt.s32.totalorder %v216, 8
    %v218 = vsel %vm217, 1, 0
    %v219 = vcvt.s32.f32 %v218
    %v220 = vsub.f32 %v201, %v211
    %v221 = vmul.f32 %v220, %v219
    %vm222 = vcmask 7168
    %v223 = vsel %vm222, %v221, 0.0
    %224 = vadd.xlane.f32.xlu0 %v223
    %v225 = vpop.xlane.xlu0 %224
    %v226 = vrot.slane %v225, 4
    %v227 = vadd.f32 %v225, %v226
    %v228 = vrot.slane %v227, 2
    %v229 = vadd.f32 %v227, %v228
    %v230 = vrot.slane %v229, 1
    %v231 = vadd.f32 %v229, %v230
    %s232 = vtos %v231
    %v233 = vstv %s232
    %234 = vst [vmem:[#allocation8] sm:$0xff] %v233
    // Predicated region
    $region46: #{tpu_custom_call.1} parent=1 // pred_check
      _
    $region47: #{tpu_custom_call.1} parent=1 // pred_check_branch
      %236 = sbr.rel (0) target = $region49
    $region48: #{tpu_custom_call.1} parent=1 // pred_region
      %238 = vsyncadd [#allocation4], 0
      %s240 = sshll.u32 [#allocation8], 4
      %s241 = int_to_ptr.vmem [resolvable:$true] %s240
      %s242 = sshll.u32 %s8, 4
      %s243 = int_to_ptr.hbm [resolvable:$true] %s242
      %245 = dma.vmem_to_hbm [thread:$0]  %s241, 128, %s243, [#allocation4]
    $region49: #{tpu_custom_call.1} parent=1 // pred_fallthru
      _
    // Predicated region
    $region50: #{tpu_custom_call.1} parent=1 // pred_check
      _
    $region51: #{tpu_custom_call.1} parent=1 // pred_check_branch
      %247 = sbr.rel (0) target = $region53
    $region52: #{tpu_custom_call.1} parent=1 // pred_region
      %249 = dma.done [#allocation4], 128
    $region53: #{tpu_custom_call.1} parent=1 // pred_fallthru
      _
    %250 = vsyncpa [#allocation3], 1
    %251 = vsyncpa [#allocation6], 1
    %252 = vsyncpa [#allocation4], 1

</llo_original>
